<compile_context>
chip_gen: v5e
topology: v5e:2x2
jax: 0.10.0
libtpu: 0.0.40
codegen_flags: <defaults>
</compile_context>

<pallas_src>
import functools

import jax
import jax.numpy as jnp
from jax.experimental import pallas as pl
from jax.experimental.pallas import tpu as pltpu

_LANE = 128
_MAX_TK = 2048  # max lane-axis (HW) tile width, multiple of 128


def _round_up(x, m):
    return ((x + m - 1) // m) * m


def _tpu_budget():
    """Return (vmem_limit_bytes, max_input_block_bytes, num_cores) for this chip."""
    vmem_bytes = 64 * 1024 * 1024  # conservative default: legal on every generation
    num_cores = 2                  # assume megacore-capable; harmless on 1-TC chips
    try:
        info = pltpu.get_tpu_info()
        cap = int(getattr(info, "vmem_capacity_bytes", 0) or 0)
        if cap > 0:
            vmem_bytes = cap
        for name in ("num_cores", "num_tensorcores", "tensorcore_count"):
            cores = int(getattr(info, name, 0) or 0)
            if cores > 0:
                num_cores = cores
                break
    except Exception:
        pass
    try:
        kind = jax.devices()[0].device_kind.lower()
        if "v7" in kind:  # 64 MiB VMEM per TensorCore, 2 TCs per chip
            vmem_bytes = min(vmem_bytes, 64 * 1024 * 1024)
            num_cores = max(num_cores, 2)
    except Exception:
        pass
    # 96 MiB limit / 24 MiB blocks on 128 MiB chips (v5e/v6e); 48 / 12 MiB on v7x.
    vmem_limit = min((vmem_bytes * 3) // 4, 96 * 1024 * 1024)
    max_block = vmem_limit // 4  # double-buffered input stays <= vmem_limit / 2
    return vmem_limit, max_block, num_cores


def _choose_tiles(m, hw, itemsize, max_block_bytes, num_cores):
    """Pick (tm, tk) tiles for the flattened (M, HW) layout."""
    # Lane (reduction) tile: full HW when it fits, otherwise prefer a
    # 128-multiple divisor of HW (uniform DMA chunks, no masked straggler tile).
    if hw <= _MAX_TK:
        tk = hw
    else:
        tk = _MAX_TK
        for cand in range(_MAX_TK, 0, -_LANE):
            if hw % cand == 0:
                tk = cand
                break
    # VMEM footprint accounting uses the *padded* row width (lanes -> mult. of 128).
    padded_tk = _round_up(tk, _LANE)
    bytes_per_row = padded_tk * itemsize
    max_rows = max(8, max_block_bytes // bytes_per_row)

    if m <= max_rows:
        tm = m
        # Guarantee >= num_cores grid steps on the "parallel" M axis so
        # multi-TensorCore chips (v7x) shard the work across cores.
        if num_cores > 1 and m >= 2 * _LANE:
            per_core = _round_up(-(-m // num_cores), _LANE)
            tm = min(tm, per_core)
    else:
        tm = max(_LANE, (max_rows // _LANE) * _LANE)
    return tm, tk


def _gap_kernel_single(x_ref, o_ref, *, hw):
    """Single HW tile (grid = (Mi,)): reduce and write directly, no scratch/pl.when."""
    vals = jnp.sum(x_ref[...].astype(jnp.float32), axis=-1) * jnp.float32(1.0 / hw)  # (tm,)
    o_ref[...] = vals[None, :].astype(o_ref.dtype)  # lane-dense (1, tm) slab


def _gap_kernel_multi(x_ref, o_ref, acc_ref, *, hw, tk, mask_tail):
    """grid = (M tiles, HW tiles); HW is the innermost ("arbitrary") reduction axis.

    x_ref:   (tm, tk) input tile
    o_ref:   (1, tm)  lane-dense output slab (written once, at the last k step)
    acc_ref: (tm, 1)  f32 scratch accumulator (keepdims layout -> no per-step relayout)
    """
    k = pl.program_id(1)
    last = pl.num_programs(1) - 1

    @pl.when(k == 0)
    def _init():
        acc_ref[...] = jnp.zeros_like(acc_ref)

    def _accum(x):
        # Fuse the f32 upcast into the reduction; keepdims keeps the result row-major.
        acc_ref[...] += jnp.sum(x.astype(jnp.float32), axis=-1, keepdims=True)

    if mask_tail:
        @pl.when(k != last)
        def _full_tile():
            _accum(x_ref[...])

        @pl.when(k == last)
        def _tail_tile():
            x = x_ref[...]
            col = k * tk + jax.lax.broadcasted_iota(jnp.int32, (1, tk), 1)
            _accum(jnp.where(col < hw, x, jnp.zeros_like(x)))
    else:
        _accum(x_ref[...])

    @pl.when(k == last)
    def _finalize():
        # Single sublane->lane relayout per i tile (trivial size-1-axis reduce).
        vals = jnp.sum(acc_ref[...], axis=-1) * jnp.float32(1.0 / hw)  # (tm,)
        o_ref[...] = vals[None, :].astype(o_ref.dtype)


def pooling_forward(x):
    """Pooling forward: 'fast' global average pool + flatten. (N, C, H, W) -> (N, C)."""
    N, C, H, W = x.shape
    M, HW = N * C, H * W
    x2 = x.reshape(M, HW)  # free reshape for contiguous NCHW; reduction axis last

    itemsize = jnp.dtype(x.dtype).itemsize
    vmem_limit, max_block, num_cores = _tpu_budget()
    tm, tk = _choose_tiles(M, HW, itemsize, max_block, num_cores)
    grid_m = pl.cdiv(M, tm)
    grid_k = pl.cdiv(HW, tk)

    cost = pl.CostEstimate(
        flops=M * HW,
        transcendentals=0,
        bytes_accessed=M * HW * itemsize + M * itemsize,
    )

    if grid_k == 1:
        kernel = functools.partial(_gap_kernel_single, hw=HW)
        grid_spec = pltpu.PrefetchScalarGridSpec(
            num_scalar_prefetch=0,
            grid=(grid_m,),
            in_specs=[pl.BlockSpec((tm, tk), lambda i: (i, 0))],
            out_specs=pl.BlockSpec((1, tm), lambda i: (0, i)),
        )
        dims = ("parallel",)
    else:
        mask_tail = (HW % tk) != 0
        kernel = functools.partial(_gap_kernel_multi, hw=HW, tk=tk, mask_tail=mask_tail)
        grid_spec = pltpu.PrefetchScalarGridSpec(
            num_scalar_prefetch=0,
            grid=(grid_m, grid_k),
            in_specs=[pl.BlockSpec((tm, tk), lambda i, k: (i, k))],
            out_specs=pl.BlockSpec((1, tm), lambda i, k: (0, i)),
            scratch_shapes=[pltpu.VMEM((tm, 1), jnp.float32)],
        )
        dims = ("parallel", "arbitrary")

    out = pl.pallas_call(
        kernel,
        out_shape=jax.ShapeDtypeStruct((1, M), x.dtype),
        grid_spec=grid_spec,
        compiler_params=pltpu.CompilerParams(
            dimension_semantics=dims,
            vmem_limit_bytes=vmem_limit,
        ),
        cost_estimate=cost,
    )(x2)

    return out.reshape(N, C)


if __name__ == "__main__":
    key = jax.random.PRNGKey(0)

    # Primary small shape consistent with the module's forward.
    N, C, H, W = 2, 4, 16, 16
    x = jax.random.normal(key, (N, C, H, W), dtype=jnp.float32)
    out = jax.block_until_ready(pooling_forward(x))
    ref = x.mean(axis=(2, 3))  # mirrors torch 'fast' global pool + flatten
    assert out.shape == (N, C)
    assert jnp.allclose(out, ref, atol=1e-5, rtol=1e-5)

    # Lane-padded small spatial (the common 7x7 global pool), single-HW-tile path.
    k1, k2 = jax.random.split(key)
    x2 = jax.random.normal(k1, (2, 4, 7, 7), dtype=jnp.float32)
    o2 = jax.block_until_ready(pooling_forward(x2))
    assert jnp.allclose(o2, x2.mean(axis=(2, 3)), atol=1e-5, rtol=1e-5)

    # Large spatial hitting the multi-HW-tile + tail-mask path (47*47 = 2209 > 2048).
    x3 = jax.random.normal(k2, (2, 3, 47, 47), dtype=jnp.float32)
    o3 = jax.block_until_ready(pooling_forward(x3))
    assert jnp.allclose(o3, x3.mean(axis=(2, 3)), atol=1e-5, rtol=1e-5)

    print("KERNEL_OK")
</pallas_src>

<mosaic_0001>
module attributes {stable_mosaic.version = 11 : i64} {
  func.func @_gap_kernel_single(%arg0: i32, %arg1: memref<8x256xf32, #tpu.memory_space<vmem>>, %arg2: memref<1x8xf32, #tpu.memory_space<vmem>>) attributes {dimension_semantics = [#tpu.dimension_semantics<parallel>], iteration_bounds = array<i64: 1>, scalar_prefetch = 0 : i64, scratch_operands = 0 : i64, tpu.core_type = #tpu.core_type<tc>, window_params = [{transform_indices = @transform_0, window_bounds = array<i64: 8, 256>}, {transform_indices = @transform_1, window_bounds = array<i64: 1, 8>}]} {
    %c0 = arith.constant 0 : index
    %c0_0 = arith.constant 0 : index
    %0 = vector.load %arg1[%c0, %c0_0] : memref<8x256xf32, #tpu.memory_space<vmem>>, vector<8x256xf32>
    %cst = arith.constant dense<0.000000e+00> : vector<8xf32>
    %1 = vector.multi_reduction <add>, %0, %cst [1] : vector<8x256xf32> to vector<8xf32>
    %cst_1 = arith.constant 3.906250e-03 : f32
    %2 = vector.broadcast %cst_1 : f32 to vector<8xf32>
    %3 = arith.mulf %1, %2 : vector<8xf32>
    %4 = vector.shape_cast %3 : vector<8xf32> to vector<1x8xf32>
    %c0_2 = arith.constant 0 : index
    %c0_3 = arith.constant 0 : index
    %5 = vector.load %arg2[%c0_2, %c0_3] : memref<1x8xf32, #tpu.memory_space<vmem>>, vector<1x8xf32>
    tpu.vector_store %arg2[%c0_2, %c0_3], %4 {strides = array<i32>} : memref<1x8xf32, #tpu.memory_space<vmem>>, vector<1x8xf32>,
    return
  }
  func.func @transform_0(%arg0: i32) -> (i32, i32) {
    %c0_i32 = arith.constant 0 : i32
    %c0_i32_0 = arith.constant 0 : i32
    return %arg0, %c0_i32 : i32, i32
  }
  func.func @transform_1(%arg0: i32) -> (i32, i32) {
    %c0_i32 = arith.constant 0 : i32
    %c0_i32_0 = arith.constant 0 : i32
    return %c0_i32, %arg0 : i32, i32
  }
}

</mosaic_0001>

<llo_original>
// kernel: tpu_custom_call.1
$region0: #{tpu_custom_call.1}
  #allocation0 [shape = 'u32[]', space=smem, size = 0x4, offset = 0x4, fixed_abs, tag = 'smem constant byte address 0x4 - core index']
  #allocation1 [shape = 'u32[72,128]{1,0:T(1,128)}', space=vmem, size = 0x9000, scoped, tag = 'internal scratch']
  %s0 = inlined_call_operand.hbm [shape: f32[8,256], index: 0, kind: input, shape index: {}]
  %s1 = inlined_call_operand.hbm [shape: f32[1,8], index: 1, kind: output, shape index: {}]
  %s2 = sld [smem:[#allocation0]]
  $region18: #{tpu_custom_call.1} parent=0
    _
  %s4 = ssub.s32 1, %s2
  %s5 = scalar_select 0, %s4, %s2
  $region1: #{tpu_custom_call.1} parent=0
    #allocation2 [shape = 'u8[8192]{0}', space=vmem, size = 0x2000, scoped, tag = 'input window, operand 0, single buffered']
    #allocation3 [shape = 's32[1]{0}', space=sflag, size = 0x4, scoped, tag = 'scoped memory for tpu_custom_call.1']
    #allocation4 [shape = 's32[1]{0}', space=sflag, size = 0x4, scoped, tag = 'scoped memory for tpu_custom_call.1']
    #allocation5 [shape = 'u8[512]{0}', space=vmem, size = 0x400, scoped, tag = 'output window, operand 0, single buffered']
    %6 = vsyncpa [#allocation3], 0
    %7 = vsyncpa [#allocation4], 0
    // Predicated region
    $region2: #{tpu_custom_call.1} parent=1 // pred_check
      _
    $region3: #{tpu_custom_call.1} parent=1 // pred_check_branch
      %9 = sbr.rel (0) target = $region5
    $region4: #{tpu_custom_call.1} parent=1 // pred_region
      %11 = vsyncadd [#allocation3], 0
      %s13 = sshll.u32 %s0, 4
      %s14 = int_to_ptr.hbm [resolvable:$true] %s13
      %s15 = sshll.u32 [#allocation2], 4
      %s16 = int_to_ptr.vmem [resolvable:$true] %s15
      %18 = dma.hbm_to_vmem [thread:$0]  %s14, 256, %s16, [#allocation3]
    $region5: #{tpu_custom_call.1} parent=1 // pred_fallthru
      _
    // Predicated region
    $region6: #{tpu_custom_call.1} parent=1 // pred_check
      _
    $region7: #{tpu_custom_call.1} parent=1 // pred_check_branch
      %20 = sbr.rel (0) target = $region9
    $region8: #{tpu_custom_call.1} parent=1 // pred_region
      %22 = dma.done [#allocation3], 256
    $region9: #{tpu_custom_call.1} parent=1 // pred_fallthru
      _
    %v23 = vld [vmem:[#allocation2] sm:$0xff]
    %v24 = vld [vmem:[#allocation2 + $0x8] sm:$0xff]
    %v25 = vadd.f32 %v23, %v24
    %26 = vadd.xlane.f32.xlu0 %v25
    %v27 = vpop.xlane.xlu0 %26
    %v28 = vmul.f32 %v27, 0.00390625
    %v30 = vlaneseq
    %v31 = vand.u32 %v30, 127
    %v32 = vperm.slane %v28, %v31
    %vm34 = vcmask 57344
    %35 = vst.msk [vmem:[#allocation5] sm:$0x1] %vm34, %v32
    // Predicated region
    $region10: #{tpu_custom_call.1} parent=1 // pred_check
      _
    $region11: #{tpu_custom_call.1} parent=1 // pred_check_branch
      %37 = sbr.rel (0) target = $region13
    $region12: #{tpu_custom_call.1} parent=1 // pred_region
      %39 = vsyncadd [#allocation4], 0
      %s41 = sshll.u32 [#allocation5], 4
      %s42 = int_to_ptr.vmem [resolvable:$true] %s41
      %s43 = sshll.u32 %s1, 4
      %s44 = int_to_ptr.hbm [resolvable:$true] %s43
      %46 = dma.vmem_to_hbm [thread:$0]  %s42, 16, %s44, [#allocation4]
    $region13: #{tpu_custom_call.1} parent=1 // pred_fallthru
      _
    // Predicated region
    $region14: #{tpu_custom_call.1} parent=1 // pred_check
      _
    $region15: #{tpu_custom_call.1} parent=1 // pred_check_branch
      %48 = sbr.rel (0) target = $region17
    $region16: #{tpu_custom_call.1} parent=1 // pred_region
      %50 = dma.done [#allocation4], 16
    $region17: #{tpu_custom_call.1} parent=1 // pred_fallthru
      _
    %51 = vsyncpa [#allocation3], 1
    %52 = vsyncpa [#allocation4], 1

</llo_original>
